<compile_context>
chip_gen: v5e
topology: v5e:2x2
jax: 0.10.0
libtpu: 0.0.40
codegen_flags: <defaults>
</compile_context>

<pallas_src>
import jax
import jax.numpy as jnp
from jax.experimental import pallas as pl
from jax.experimental.pallas import tpu as pltpu

_HI = jax.lax.Precision.HIGHEST


def _mlp_kernel(x_ref, w1_ref, b1_ref, w2_ref, b2_ref, w3_ref, b3_ref, o_ref):
    """One batch tile. x_ref is (8, T): features on sublanes, batch on lanes."""
    x = x_ref[...]                                                    # (8, T) f32

    # hidden1 + ReLU   -> (12, T)
    h1 = jnp.dot(w1_ref[...], x,
                 preferred_element_type=jnp.float32, precision=_HI) + b1_ref[...]
    h1 = jnp.maximum(h1, 0.0)

    # hidden2 + ReLU   -> (8, T)
    h2 = jnp.dot(w2_ref[...], h1,
                 preferred_element_type=jnp.float32, precision=_HI) + b2_ref[...]
    h2 = jnp.maximum(h2, 0.0)

    # Sigmoid THEN the output Linear (matches the reference forward exactly).
    # h2 >= 0 after ReLU, so exp(-h2) is in (0, 1] -> no overflow even for padded
    # garbage columns (which are discarded by the wrapper anyway).
    s = 1.0 / (1.0 + jnp.exp(-h2))                                    # (8, T)

    # output Linear, no activation after it -> (1, T), lane-dense store.
    o_ref[...] = jnp.dot(w3_ref[...], s,
                         preferred_element_type=jnp.float32, precision=_HI) + b3_ref[...]


def _round_up(a, m):
    return ((a + m - 1) // m) * m


def pima_classifier_forward(x, params, *, tile_n=8192):
    """x: (N, 8) float32.

    params (PyTorch nn.Linear layout):
      w1 (12, 8), b1 (12, 1), w2 (8, 12), b2 (8, 1), w3 (1, 8), b3 (1, 1).
    Returns (N, 1) float32.
    """
    n = x.shape[0]

    # Batch tile: lane axis must be a multiple of 128.  Cap it by the (rounded-up)
    # batch so small batches do not over-pad; 8192 keeps per-buffer VMEM at 256 KiB
    # (double-buffered inputs + outputs << scoped-VMEM default on every chip) while
    # amortizing the ~0.35 us per-grid-step overhead.
    tile = min(tile_n, _round_up(n, 128))
    tile = _round_up(tile, 128)
    n_pad = _round_up(n, tile)
    grid = (n_pad // tile,)

    # Batch-on-lanes layout: (N, 8) -> (8, N_pad).
    xt = x.T
    if n_pad != n:
        xt = jnp.pad(xt, ((0, 0), (0, n_pad - n)))

    const = lambda i: (0, 0)   # weights/biases: one DMA, then resident in VMEM

    out_t = pl.pallas_call(
        _mlp_kernel,
        out_shape=jax.ShapeDtypeStruct((1, n_pad), jnp.float32),
        grid=grid,
        in_specs=[
            pl.BlockSpec((8, tile), lambda i: (0, i)),   # x (transposed)
            pl.BlockSpec((12, 8), const),                # w1
            pl.BlockSpec((12, 1), const),                # b1
            pl.BlockSpec((8, 12), const),                # w2
            pl.BlockSpec((8, 1), const),                 # b2
            pl.BlockSpec((1, 8), const),                 # w3
            pl.BlockSpec((1, 1), const),                 # b3
        ],
        out_specs=pl.BlockSpec((1, tile), lambda i: (0, i)),
        compiler_params=pltpu.CompilerParams(
            dimension_semantics=("parallel",),           # shard batch across TCs (v7x)
        ),
    )(
        xt,
        params["w1"], params["b1"],
        params["w2"], params["b2"],
        params["w3"], params["b3"],
    )

    # Drop padded columns (they carry sigmoid-of-padding garbage) and return (N, 1).
    return out_t[:, :n].T


def init_params(key):
    """Deterministic synthetic parameters in PyTorch nn.Linear layout (out, in)."""
    k1, k2, k3, k4, k5, k6 = jax.random.split(key, 6)
    scale = 0.1
    return {
        "w1": scale * jax.random.normal(k1, (12, 8), jnp.float32),
        "b1": scale * jax.random.normal(k2, (12, 1), jnp.float32),
        "w2": scale * jax.random.normal(k3, (8, 12), jnp.float32),
        "b2": scale * jax.random.normal(k4, (8, 1), jnp.float32),
        "w3": scale * jax.random.normal(k5, (1, 8), jnp.float32),
        "b3": scale * jax.random.normal(k6, (1, 1), jnp.float32),
    }


def _reference_forward(x, p):
    """Pure-JAX reference mirroring the PyTorch forward."""
    h1 = jnp.maximum(jnp.dot(x, p["w1"].T, precision=_HI) + p["b1"][:, 0], 0.0)
    h2 = jnp.maximum(jnp.dot(h1, p["w2"].T, precision=_HI) + p["b2"][:, 0], 0.0)
    s = 1.0 / (1.0 + jnp.exp(-h2))
    return jnp.dot(s, p["w3"].T, precision=_HI) + p["b3"][:, 0]


if __name__ == "__main__":
    key = jax.random.PRNGKey(0)
    kx, kp = jax.random.split(key)

    batch = 8
    x = jax.random.normal(kx, (batch, 8), jnp.float32)
    params = init_params(kp)

    out = pima_classifier_forward(x, params)
    out = jax.block_until_ready(out)

    ref = _reference_forward(x, params)
    assert out.shape == (batch, 1), out.shape
    err = float(jnp.max(jnp.abs(out - ref)))
    assert jnp.allclose(out, ref, atol=1e-5, rtol=1e-5), err

    print("KERNEL_OK")
</pallas_src>

<mosaic_0001>
module attributes {stable_mosaic.version = 11 : i64} {
  func.func @_mlp_kernel(%arg0: i32, %arg1: memref<8x128xf32, #tpu.memory_space<vmem>>, %arg2: memref<12x8xf32, #tpu.memory_space<vmem>>, %arg3: memref<12x1xf32, #tpu.memory_space<vmem>>, %arg4: memref<8x12xf32, #tpu.memory_space<vmem>>, %arg5: memref<8x1xf32, #tpu.memory_space<vmem>>, %arg6: memref<1x8xf32, #tpu.memory_space<vmem>>, %arg7: memref<1x1xf32, #tpu.memory_space<vmem>>, %arg8: memref<1x128xf32, #tpu.memory_space<vmem>>) attributes {dimension_semantics = [#tpu.dimension_semantics<parallel>], iteration_bounds = array<i64: 1>, scalar_prefetch = 0 : i64, scratch_operands = 0 : i64, tpu.core_type = #tpu.core_type<tc>, window_params = [{transform_indices = @transform_0, window_bounds = array<i64: 8, 128>}, {pipeline_mode = #tpu.pipeline_mode<synchronous>, transform_indices = @transform_1, window_bounds = array<i64: 12, 8>}, {pipeline_mode = #tpu.pipeline_mode<synchronous>, transform_indices = @transform_2, window_bounds = array<i64: 12, 1>}, {pipeline_mode = #tpu.pipeline_mode<synchronous>, transform_indices = @transform_3, window_bounds = array<i64: 8, 12>}, {pipeline_mode = #tpu.pipeline_mode<synchronous>, transform_indices = @transform_4, window_bounds = array<i64: 8, 1>}, {pipeline_mode = #tpu.pipeline_mode<synchronous>, transform_indices = @transform_5, window_bounds = array<i64: 1, 8>}, {pipeline_mode = #tpu.pipeline_mode<synchronous>, transform_indices = @transform_6, window_bounds = array<i64: 1, 1>}, {transform_indices = @transform_7, window_bounds = array<i64: 1, 128>}]} {
    %c0 = arith.constant 0 : index
    %c0_0 = arith.constant 0 : index
    %0 = vector.load %arg1[%c0, %c0_0] : memref<8x128xf32, #tpu.memory_space<vmem>>, vector<8x128xf32>
    %c0_1 = arith.constant 0 : index
    %c0_2 = arith.constant 0 : index
    %1 = vector.load %arg2[%c0_1, %c0_2] : memref<12x8xf32, #tpu.memory_space<vmem>>, vector<12x8xf32>
    %cst = arith.constant dense<0.000000e+00> : vector<12x128xf32>
    %2 = tpu.matmul %1, %0, %cst {dimension_numbers = #tpu.dot_dimension_numbers<[1], [0], [0], [1], [0, 0, 1, 1], [], []>, precision = #tpu.contract_precision<fp32>} : vector<12x8xf32>, vector<8x128xf32>, vector<12x128xf32> -> vector<12x128xf32>
    %c0_3 = arith.constant 0 : index
    %c0_4 = arith.constant 0 : index
    %3 = vector.load %arg3[%c0_3, %c0_4] : memref<12x1xf32, #tpu.memory_space<vmem>>, vector<12x1xf32>
    %4 = vector.broadcast %3 : vector<12x1xf32> to vector<12x128xf32>
    %5 = arith.addf %2, %4 : vector<12x128xf32>
    %cst_5 = arith.constant 0.000000e+00 : f32
    %6 = vector.broadcast %cst_5 : f32 to vector<12x128xf32>
    %7 = arith.maximumf %5, %6 : vector<12x128xf32>
    %c0_6 = arith.constant 0 : index
    %c0_7 = arith.constant 0 : index
    %8 = vector.load %arg4[%c0_6, %c0_7] : memref<8x12xf32, #tpu.memory_space<vmem>>, vector<8x12xf32>
    %cst_8 = arith.constant dense<0.000000e+00> : vector<8x128xf32>
    %9 = tpu.matmul %8, %7, %cst_8 {dimension_numbers = #tpu.dot_dimension_numbers<[1], [0], [0], [1], [0, 0, 1, 1], [], []>, precision = #tpu.contract_precision<fp32>} : vector<8x12xf32>, vector<12x128xf32>, vector<8x128xf32> -> vector<8x128xf32>
    %c0_9 = arith.constant 0 : index
    %c0_10 = arith.constant 0 : index
    %10 = vector.load %arg5[%c0_9, %c0_10] : memref<8x1xf32, #tpu.memory_space<vmem>>, vector<8x1xf32>
    %11 = vector.broadcast %10 : vector<8x1xf32> to vector<8x128xf32>
    %12 = arith.addf %9, %11 : vector<8x128xf32>
    %cst_11 = arith.constant 0.000000e+00 : f32
    %13 = vector.broadcast %cst_11 : f32 to vector<8x128xf32>
    %14 = arith.maximumf %12, %13 : vector<8x128xf32>
    %cst_12 = arith.constant 0.000000e+00 : f32
    %15 = vector.broadcast %cst_12 : f32 to vector<8x128xf32>
    %16 = arith.subf %15, %14 : vector<8x128xf32>
    %17 = math.exp %16 : vector<8x128xf32>
    %cst_13 = arith.constant 1.000000e+00 : f32
    %18 = vector.broadcast %cst_13 : f32 to vector<8x128xf32>
    %19 = arith.addf %18, %17 : vector<8x128xf32>
    %cst_14 = arith.constant 1.000000e+00 : f32
    %20 = vector.broadcast %cst_14 : f32 to vector<8x128xf32>
    %21 = arith.divf %20, %19 : vector<8x128xf32>
    %c0_15 = arith.constant 0 : index
    %c0_16 = arith.constant 0 : index
    %22 = vector.load %arg6[%c0_15, %c0_16] : memref<1x8xf32, #tpu.memory_space<vmem>>, vector<1x8xf32>
    %cst_17 = arith.constant dense<0.000000e+00> : vector<1x128xf32>
    %23 = tpu.matmul %22, %21, %cst_17 {dimension_numbers = #tpu.dot_dimension_numbers<[1], [0], [0], [1], [0, 0, 1, 1], [], []>, precision = #tpu.contract_precision<fp32>} : vector<1x8xf32>, vector<8x128xf32>, vector<1x128xf32> -> vector<1x128xf32>
    %c0_18 = arith.constant 0 : index
    %c0_19 = arith.constant 0 : index
    %24 = vector.load %arg7[%c0_18, %c0_19] : memref<1x1xf32, #tpu.memory_space<vmem>>, vector<1x1xf32>
    %25 = vector.broadcast %24 : vector<1x1xf32> to vector<1x128xf32>
    %26 = arith.addf %23, %25 : vector<1x128xf32>
    %c0_20 = arith.constant 0 : index
    %c0_21 = arith.constant 0 : index
    %27 = vector.load %arg8[%c0_20, %c0_21] : memref<1x128xf32, #tpu.memory_space<vmem>>, vector<1x128xf32>
    tpu.vector_store %arg8[%c0_20, %c0_21], %26 {strides = array<i32>} : memref<1x128xf32, #tpu.memory_space<vmem>>, vector<1x128xf32>,
    return
  }
  func.func @transform_0(%arg0: i32) -> (i32, i32) {
    %c0_i32 = arith.constant 0 : i32
    %c0_i32_0 = arith.constant 0 : i32
    return %c0_i32, %arg0 : i32, i32
  }
  func.func @transform_1(%arg0: i32) -> (i32, i32) {
    %c0_i32 = arith.constant 0 : i32
    %c0_i32_0 = arith.constant 0 : i32
    %c0_i32_1 = arith.constant 0 : i32
    return %c0_i32, %c0_i32_0 : i32, i32
  }
  func.func @transform_2(%arg0: i32) -> (i32, i32) {
    %c0_i32 = arith.constant 0 : i32
    %c0_i32_0 = arith.constant 0 : i32
    %c0_i32_1 = arith.constant 0 : i32
    return %c0_i32, %c0_i32_0 : i32, i32
  }
  func.func @transform_3(%arg0: i32) -> (i32, i32) {
    %c0_i32 = arith.constant 0 : i32
    %c0_i32_0 = arith.constant 0 : i32
    %c0_i32_1 = arith.constant 0 : i32
    return %c0_i32, %c0_i32_0 : i32, i32
  }
  func.func @transform_4(%arg0: i32) -> (i32, i32) {
    %c0_i32 = arith.constant 0 : i32
    %c0_i32_0 = arith.constant 0 : i32
    %c0_i32_1 = arith.constant 0 : i32
    return %c0_i32, %c0_i32_0 : i32, i32
  }
  func.func @transform_5(%arg0: i32) -> (i32, i32) {
    %c0_i32 = arith.constant 0 : i32
    %c0_i32_0 = arith.constant 0 : i32
    %c0_i32_1 = arith.constant 0 : i32
    return %c0_i32, %c0_i32_0 : i32, i32
  }
  func.func @transform_6(%arg0: i32) -> (i32, i32) {
    %c0_i32 = arith.constant 0 : i32
    %c0_i32_0 = arith.constant 0 : i32
    %c0_i32_1 = arith.constant 0 : i32
    return %c0_i32, %c0_i32_0 : i32, i32
  }
  func.func @transform_7(%arg0: i32) -> (i32, i32) {
    %c0_i32 = arith.constant 0 : i32
    %c0_i32_0 = arith.constant 0 : i32
    return %c0_i32, %arg0 : i32, i32
  }
}

</mosaic_0001>

<llo_original>
// kernel: tpu_custom_call.1
$region0: #{tpu_custom_call.1}
  #allocation0 [shape = 'u32[]', space=smem, size = 0x4, offset = 0x4, fixed_abs, tag = 'smem constant byte address 0x4 - core index']
  #allocation1 [shape = 'u32[72,128]{1,0:T(1,128)}', space=vmem, size = 0x9000, scoped, tag = 'internal scratch']
  #allocation2 [shape = 'f32[1,1]{1,0:T(1,128)S(1)}', space=vmem, size = 0x200, scoped, tag = 'scoped memory for tpu_custom_call.1']
  %s0 = inlined_call_operand.vmem [shape: f32[8,128], index: 0, kind: input, shape index: {}]
  %s1 = inlined_call_operand.vmem [shape: f32[12,8], index: 1, kind: input, shape index: {}]
  %s2 = inlined_call_operand.vmem [shape: f32[12,1], index: 2, kind: input, shape index: {}]
  %s3 = inlined_call_operand.vmem [shape: f32[8,12], index: 3, kind: input, shape index: {}]
  %s4 = inlined_call_operand.vmem [shape: f32[8,1], index: 4, kind: input, shape index: {}]
  %s5 = inlined_call_operand.vmem [shape: f32[1,8], index: 5, kind: input, shape index: {}]
  %s6 = inlined_call_operand.<no memory space> [shape: f32[1,1], index: 6, kind: input, shape index: {}]
  %s7 = inlined_call_operand.hbm [shape: f32[1,128], index: 7, kind: output, shape index: {}]
  %s8 = sld [smem:[#allocation0]]
  $region38: #{tpu_custom_call.1} parent=0
    _
  %s10 = ssub.s32 1, %s8
  %s11 = scalar_select 0, %s10, %s8
  %v12 = vstv %s6
  %13 = vst [vmem:[#allocation2] sm:$0x1] %v12
  $region1: #{tpu_custom_call.1} parent=0
    #allocation3 [shape = 'u8[512]{0}', space=vmem, size = 0x400, scoped, tag = 'output window, operand 0, single buffered']
    #allocation4 [shape = 's32[1]{0}', space=sflag, size = 0x4, scoped, tag = 'scoped memory for tpu_custom_call.1']
    %14 = vsyncpa [#allocation4], 0
    // Predicated region
    $region2: #{tpu_custom_call.1} parent=1 // pred_check
      _
    $region3: #{tpu_custom_call.1} parent=1 // pred_check_branch
      %16 = sbr.rel (0) target = $region5
    $region4: #{tpu_custom_call.1} parent=1 // pred_region
      _
    $region5: #{tpu_custom_call.1} parent=1 // pred_fallthru
      _
    // Predicated region
    $region6: #{tpu_custom_call.1} parent=1 // pred_check
      _
    $region7: #{tpu_custom_call.1} parent=1 // pred_check_branch
      %18 = sbr.rel (0) target = $region9
    $region8: #{tpu_custom_call.1} parent=1 // pred_region
      _
    $region9: #{tpu_custom_call.1} parent=1 // pred_fallthru
      _
    // Predicated region
    $region10: #{tpu_custom_call.1} parent=1 // pred_check
      _
    $region11: #{tpu_custom_call.1} parent=1 // pred_check_branch
      %20 = sbr.rel (0) target = $region13
    $region12: #{tpu_custom_call.1} parent=1 // pred_region
      _
    $region13: #{tpu_custom_call.1} parent=1 // pred_fallthru
      _
    // Predicated region
    $region14: #{tpu_custom_call.1} parent=1 // pred_check
      _
    $region15: #{tpu_custom_call.1} parent=1 // pred_check_branch
      %22 = sbr.rel (0) target = $region17
    $region16: #{tpu_custom_call.1} parent=1 // pred_region
      _
    $region17: #{tpu_custom_call.1} parent=1 // pred_fallthru
      _
    // Predicated region
    $region18: #{tpu_custom_call.1} parent=1 // pred_check
      _
    $region19: #{tpu_custom_call.1} parent=1 // pred_check_branch
      %24 = sbr.rel (0) target = $region21
    $region20: #{tpu_custom_call.1} parent=1 // pred_region
      _
    $region21: #{tpu_custom_call.1} parent=1 // pred_fallthru
      _
    // Predicated region
    $region22: #{tpu_custom_call.1} parent=1 // pred_check
      _
    $region23: #{tpu_custom_call.1} parent=1 // pred_check_branch
      %26 = sbr.rel (0) target = $region25
    $region24: #{tpu_custom_call.1} parent=1 // pred_region
      _
    $region25: #{tpu_custom_call.1} parent=1 // pred_fallthru
      _
    // Predicated region
    $region26: #{tpu_custom_call.1} parent=1 // pred_check
      _
    $region27: #{tpu_custom_call.1} parent=1 // pred_check_branch
      %28 = sbr.rel (0) target = $region29
    $region28: #{tpu_custom_call.1} parent=1 // pred_region
      _
    $region29: #{tpu_custom_call.1} parent=1 // pred_fallthru
      _
    %v29 = vld [vmem:[%s0] sm:$0xff]
    %v30 = vld [vmem:[%s1] sm:$0xff]
    %v31 = vld [vmem:[%s1 + $0x8] sm:$0xf]
    %v32 = vld [vmem:[%s2] sm:$0xff]
    %v33 = vld [vmem:[%s2 + $0x8] sm:$0xf]
    %35 = vset.pattern.permute.xlu0 0
    %36 = vperm.xlu0 %35, %v32
    %v37 = vpop.permute.xlu0 %36
    %40 = vset.pattern.permute.xlu0 0
    %41 = vperm.xlu0 %40, %v33
    %v42 = vpop.permute.xlu0 %41
    %vm44 = vcmask 64512
    %v46 = vsel %vm44, %v30, 0
    %v49 = vsel %vm44, %v31, 0
    %51 = vmatpush.msra.mxu0 0.0
    %52 = vmatpush.msra.mxu0 0.0
    %53 = vmatpush.msra.mxu0 0.0
    %54 = vmatpush.msra.mxu0 0.0
    %55 = vmatpush.msra.mxu0 0.0
    %56 = vmatpush.msra.mxu0 0.0
    %57 = vmatpush.msra.mxu0 0.0
    %58 = vmatpush.msra.mxu0 0.0
    %59 = vmatpush.msra.mxu0 0.0
    %60 = vmatpush.msra.mxu0 0.0
    %61 = vmatpush.msra.mxu0 0.0
    %62 = vmatpush.msra.mxu0 0.0
    %63 = vmatpush.msra.mxu0 0.0
    %64 = vmatpush.msra.mxu0 0.0
    %65 = vmatpush.msra.mxu0 0.0
    %v66 = vand.u32 %v29, 4294901760
    %67 = vmatpush.msra.mxu0 %v66
    %v68 = vand.u32 %v46, 4294901760
    %v69 = vsub.f32 %v46, %v68
    %v70 = vand.u32 %v69, 4294901760
    %v71 = vsub.f32 %v69, %v70
    %v72 = vand.u32 %v71, 4294901760
    %73 = vmatmul.f32.gmra.mxu0 %v72
    %v74 = vpop.f32.mrf.mxu0
    %v75 = vadd.f32 %v37, %v74
    %v76 = vand.u32 %v49, 4294901760
    %v77 = vsub.f32 %v49, %v76
    %v78 = vand.u32 %v77, 4294901760
    %v79 = vsub.f32 %v77, %v78
    %v80 = vand.u32 %v79, 4294901760
    %81 = vmatmul.f32.gmra.mxu0 %v80
    %v82 = vpop.f32.mrf.mxu0
    %v83 = vadd.f32 %v42, %v82
    %84 = vdwg.mxu0
    %85 = vmatpush.msra.mxu0 0.0
    %86 = vmatpush.msra.mxu0 0.0
    %87 = vmatpush.msra.mxu0 0.0
    %88 = vmatpush.msra.mxu0 0.0
    %89 = vmatpush.msra.mxu0 0.0
    %90 = vmatpush.msra.mxu0 0.0
    %91 = vmatpush.msra.mxu0 0.0
    %92 = vmatpush.msra.mxu0 0.0
    %93 = vmatpush.msra.mxu0 0.0
    %94 = vmatpush.msra.mxu0 0.0
    %95 = vmatpush.msra.mxu0 0.0
    %96 = vmatpush.msra.mxu0 0.0
    %97 = vmatpush.msra.mxu0 0.0
    %98 = vmatpush.msra.mxu0 0.0
    %99 = vmatpush.msra.mxu0 0.0
    %v100 = vand.u32 %v29, 4294901760
    %v101 = vsub.f32 %v29, %v100
    %v102 = vand.u32 %v101, 4294901760
    %v103 = vsub.f32 %v101, %v102
    %v104 = vand.u32 %v103, 4294901760
    %105 = vmatpush.msra.mxu0 %v104
    %v106 = vand.u32 %v46, 4294901760
    %107 = vmatmul.f32.gmra.mxu0 %v106
    %v108 = vpop.f32.mrf.mxu0
    %v109 = vadd.f32 %v75, %v108
    %v110 = vand.u32 %v49, 4294901760
    %111 = vmatmul.f32.gmra.mxu0 %v110
    %v112 = vpop.f32.mrf.mxu0
    %v113 = vadd.f32 %v83, %v112
    %114 = vdwg.mxu0
    %115 = vmatpush.msra.mxu0 0.0
    %116 = vmatpush.msra.mxu0 0.0
    %117 = vmatpush.msra.mxu0 0.0
    %118 = vmatpush.msra.mxu0 0.0
    %119 = vmatpush.msra.mxu0 0.0
    %120 = vmatpush.msra.mxu0 0.0
    %121 = vmatpush.msra.mxu0 0.0
    %122 = vmatpush.msra.mxu0 0.0
    %123 = vmatpush.msra.mxu0 0.0
    %124 = vmatpush.msra.mxu0 0.0
    %125 = vmatpush.msra.mxu0 0.0
    %126 = vmatpush.msra.mxu0 0.0
    %127 = vmatpush.msra.mxu0 0.0
    %128 = vmatpush.msra.mxu0 0.0
    %129 = vmatpush.msra.mxu0 0.0
    %v130 = vand.u32 %v29, 4294901760
    %v131 = vsub.f32 %v29, %v130
    %132 = vmatpush.msra.mxu0 %v131
    %v133 = vand.u32 %v46, 4294901760
    %v134 = vsub.f32 %v46, %v133
    %135 = vmatmul.f32.gmra.mxu0 %v134
    %v136 = vpop.f32.mrf.mxu0
    %v137 = vadd.f32 %v109, %v136
    %v138 = vand.u32 %v49, 4294901760
    %v139 = vsub.f32 %v49, %v138
    %140 = vmatmul.f32.gmra.mxu0 %v139
    %v141 = vpop.f32.mrf.mxu0
    %v142 = vadd.f32 %v113, %v141
    %143 = vdwg.mxu0
    %144 = vmatpush.msra.mxu0 0.0
    %145 = vmatpush.msra.mxu0 0.0
    %146 = vmatpush.msra.mxu0 0.0
    %147 = vmatpush.msra.mxu0 0.0
    %148 = vmatpush.msra.mxu0 0.0
    %149 = vmatpush.msra.mxu0 0.0
    %150 = vmatpush.msra.mxu0 0.0
    %151 = vmatpush.msra.mxu0 0.0
    %152 = vmatpush.msra.mxu0 0.0
    %153 = vmatpush.msra.mxu0 0.0
    %154 = vmatpush.msra.mxu0 0.0
    %155 = vmatpush.msra.mxu0 0.0
    %156 = vmatpush.msra.mxu0 0.0
    %157 = vmatpush.msra.mxu0 0.0
    %158 = vmatpush.msra.mxu0 0.0
    %v159 = vand.u32 %v29, 4294901760
    %160 = vmatpush.msra.mxu0 %v159
    %v161 = vand.u32 %v46, 4294901760
    %v162 = vsub.f32 %v46, %v161
    %v163 = vand.u32 %v162, 4294901760
    %164 = vmatmul.f32.gmra.mxu0 %v163
    %v165 = vpop.f32.mrf.mxu0
    %v166 = vadd.f32 %v137, %v165
    %v167 = vand.u32 %v49, 4294901760
    %v168 = vsub.f32 %v49, %v167
    %v169 = vand.u32 %v168, 4294901760
    %170 = vmatmul.f32.gmra.mxu0 %v169
    %v171 = vpop.f32.mrf.mxu0
    %v172 = vadd.f32 %v142, %v171
    %173 = vdwg.mxu0
    %174 = vmatpush.msra.mxu0 0.0
    %175 = vmatpush.msra.mxu0 0.0
    %176 = vmatpush.msra.mxu0 0.0
    %177 = vmatpush.msra.mxu0 0.0
    %178 = vmatpush.msra.mxu0 0.0
    %179 = vmatpush.msra.mxu0 0.0
    %180 = vmatpush.msra.mxu0 0.0
    %181 = vmatpush.msra.mxu0 0.0
    %182 = vmatpush.msra.mxu0 0.0
    %183 = vmatpush.msra.mxu0 0.0
    %184 = vmatpush.msra.mxu0 0.0
    %185 = vmatpush.msra.mxu0 0.0
    %186 = vmatpush.msra.mxu0 0.0
    %187 = vmatpush.msra.mxu0 0.0
    %188 = vmatpush.msra.mxu0 0.0
    %v189 = vand.u32 %v29, 4294901760
    %v190 = vsub.f32 %v29, %v189
    %v191 = vand.u32 %v190, 4294901760
    %192 = vmatpush.msra.mxu0 %v191
    %v193 = vand.u32 %v46, 4294901760
    %194 = vmatmul.f32.gmra.mxu0 %v193
    %v195 = vpop.f32.mrf.mxu0
    %v196 = vadd.f32 %v166, %v195
    %v197 = vand.u32 %v49, 4294901760
    %198 = vmatmul.f32.gmra.mxu0 %v197
    %v199 = vpop.f32.mrf.mxu0
    %v200 = vadd.f32 %v172, %v199
    %201 = vdwg.mxu0
    %202 = vmatpush.msra.mxu0 0.0
    %203 = vmatpush.msra.mxu0 0.0
    %204 = vmatpush.msra.mxu0 0.0
    %205 = vmatpush.msra.mxu0 0.0
    %206 = vmatpush.msra.mxu0 0.0
    %207 = vmatpush.msra.mxu0 0.0
    %208 = vmatpush.msra.mxu0 0.0
    %209 = vmatpush.msra.mxu0 0.0
    %210 = vmatpush.msra.mxu0 0.0
    %211 = vmatpush.msra.mxu0 0.0
    %212 = vmatpush.msra.mxu0 0.0
    %213 = vmatpush.msra.mxu0 0.0
    %214 = vmatpush.msra.mxu0 0.0
    %215 = vmatpush.msra.mxu0 0.0
    %216 = vmatpush.msra.mxu0 0.0
    %v217 = vand.u32 %v29, 4294901760
    %218 = vmatpush.msra.mxu0 %v217
    %v219 = vand.u32 %v46, 4294901760
    %220 = vmatmul.f32.gmra.mxu0 %v219
    %v221 = vpop.f32.mrf.mxu0
    %v222 = vadd.f32 %v196, %v221
    %v223 = vand.u32 %v49, 4294901760
    %224 = vmatmul.f32.gmra.mxu0 %v223
    %v225 = vpop.f32.mrf.mxu0
    %v226 = vadd.f32 %v200, %v225
    %227 = vdwg.mxu0
    %v228 = vmax.f32 %v222, 0.0
    %v229 = vmax.f32 %v226, 0.0
    %v230 = vld [vmem:[%s3] sm:$0xff]
    %v231 = vld [vmem:[%s4] sm:$0xff]
    %233 = vset.pattern.permute.xlu0 0
    %234 = vperm.xlu0 %233, %v231
    %v235 = vpop.permute.xlu0 %234
    %vm237 = vcmask 97280
    %v239 = vsel %vm237, %v230, 0
    %vm241 = vcmask 1043456
    %v243 = vsel %vm241, %v229, 0
    %245 = vmatpush.msra.mxu0 0.0
    %246 = vmatpush.msra.mxu0 0.0
    %247 = vmatpush.msra.mxu0 0.0
    %248 = vmatpush.msra.mxu0 0.0
    %249 = vmatpush.msra.mxu0 0.0
    %250 = vmatpush.msra.mxu0 0.0
    %251 = vmatpush.msra.mxu0 0.0
    %252 = vmatpush.msra.mxu0 0.0
    %253 = vmatpush.msra.mxu0 0.0
    %254 = vmatpush.msra.mxu0 0.0
    %255 = vmatpush.msra.mxu0 0.0
    %256 = vmatpush.msra.mxu0 0.0
    %257 = vmatpush.msra.mxu0 0.0
    %258 = vmatpush.msra.mxu0 0.0
    %v259 = vand.u32 %v243, 4294901760
    %260 = vmatpush.msra.mxu0 %v259
    %v261 = vand.u32 %v228, 4294901760
    %262 = vmatpush.msra.mxu0 %v261
    %v263 = vand.u32 %v239, 4294901760
    %v264 = vsub.f32 %v239, %v263
    %v265 = vand.u32 %v264, 4294901760
    %v266 = vsub.f32 %v264, %v265
    %v267 = vand.u32 %v266, 4294901760
    %268 = vmatmul.f32.gmra.mxu0 %v267
    %v269 = vpop.f32.mrf.mxu0
    %v270 = vadd.f32 %v235, %v269
    %271 = vdwg.mxu0
    %272 = vmatpush.msra.mxu0 0.0
    %273 = vmatpush.msra.mxu0 0.0
    %274 = vmatpush.msra.mxu0 0.0
    %275 = vmatpush.msra.mxu0 0.0
    %276 = vmatpush.msra.mxu0 0.0
    %277 = vmatpush.msra.mxu0 0.0
    %278 = vmatpush.msra.mxu0 0.0
    %279 = vmatpush.msra.mxu0 0.0
    %280 = vmatpush.msra.mxu0 0.0
    %281 = vmatpush.msra.mxu0 0.0
    %282 = vmatpush.msra.mxu0 0.0
    %283 = vmatpush.msra.mxu0 0.0
    %284 = vmatpush.msra.mxu0 0.0
    %285 = vmatpush.msra.mxu0 0.0
    %v286 = vand.u32 %v243, 4294901760
    %v287 = vsub.f32 %v243, %v286
    %v288 = vand.u32 %v287, 4294901760
    %v289 = vsub.f32 %v287, %v288
    %v290 = vand.u32 %v289, 4294901760
    %291 = vmatpush.msra.mxu0 %v290
    %v292 = vand.u32 %v228, 4294901760
    %v293 = vsub.f32 %v228, %v292
    %v294 = vand.u32 %v293, 4294901760
    %v295 = vsub.f32 %v293, %v294
    %v296 = vand.u32 %v295, 4294901760
    %297 = vmatpush.msra.mxu0 %v296
    %v298 = vand.u32 %v239, 4294901760
    %299 = vmatmul.f32.gmra.mxu0 %v298
    %v300 = vpop.f32.mrf.mxu0
    %v301 = vadd.f32 %v270, %v300
    %302 = vdwg.mxu0
    %303 = vmatpush.msra.mxu0 0.0
    %304 = vmatpush.msra.mxu0 0.0
    %305 = vmatpush.msra.mxu0 0.0
    %306 = vmatpush.msra.mxu0 0.0
    %307 = vmatpush.msra.mxu0 0.0
    %308 = vmatpush.msra.mxu0 0.0
    %309 = vmatpush.msra.mxu0 0.0
    %310 = vmatpush.msra.mxu0 0.0
    %311 = vmatpush.msra.mxu0 0.0
    %312 = vmatpush.msra.mxu0 0.0
    %313 = vmatpush.msra.mxu0 0.0
    %314 = vmatpush.msra.mxu0 0.0
    %315 = vmatpush.msra.mxu0 0.0
    %316 = vmatpush.msra.mxu0 0.0
    %v317 = vand.u32 %v243, 4294901760
    %v318 = vsub.f32 %v243, %v317
    %319 = vmatpush.msra.mxu0 %v318
    %v320 = vand.u32 %v228, 4294901760
    %v321 = vsub.f32 %v228, %v320
    %322 = vmatpush.msra.mxu0 %v321
    %v323 = vand.u32 %v239, 4294901760
    %v324 = vsub.f32 %v239, %v323
    %325 = vmatmul.f32.gmra.mxu0 %v324
    %v326 = vpop.f32.mrf.mxu0
    %v327 = vadd.f32 %v301, %v326
    %328 = vdwg.mxu0
    %329 = vmatpush.msra.mxu0 0.0
    %330 = vmatpush.msra.mxu0 0.0
    %331 = vmatpush.msra.mxu0 0.0
    %332 = vmatpush.msra.mxu0 0.0
    %333 = vmatpush.msra.mxu0 0.0
    %334 = vmatpush.msra.mxu0 0.0
    %335 = vmatpush.msra.mxu0 0.0
    %336 = vmatpush.msra.mxu0 0.0
    %337 = vmatpush.msra.mxu0 0.0
    %338 = vmatpush.msra.mxu0 0.0
    %339 = vmatpush.msra.mxu0 0.0
    %340 = vmatpush.msra.mxu0 0.0
    %341 = vmatpush.msra.mxu0 0.0
    %342 = vmatpush.msra.mxu0 0.0
    %v343 = vand.u32 %v243, 4294901760
    %344 = vmatpush.msra.mxu0 %v343
    %v345 = vand.u32 %v228, 4294901760
    %346 = vmatpush.msra.mxu0 %v345
    %v347 = vand.u32 %v239, 4294901760
    %v348 = vsub.f32 %v239, %v347
    %v349 = vand.u32 %v348, 4294901760
    %350 = vmatmul.f32.gmra.mxu0 %v349
    %v351 = vpop.f32.mrf.mxu0
    %v352 = vadd.f32 %v327, %v351
    %353 = vdwg.mxu0
    %354 = vmatpush.msra.mxu0 0.0
    %355 = vmatpush.msra.mxu0 0.0
    %356 = vmatpush.msra.mxu0 0.0
    %357 = vmatpush.msra.mxu0 0.0
    %358 = vmatpush.msra.mxu0 0.0
    %359 = vmatpush.msra.mxu0 0.0
    %360 = vmatpush.msra.mxu0 0.0
    %361 = vmatpush.msra.mxu0 0.0
    %362 = vmatpush.msra.mxu0 0.0
    %363 = vmatpush.msra.mxu0 0.0
    %364 = vmatpush.msra.mxu0 0.0
    %365 = vmatpush.msra.mxu0 0.0
    %366 = vmatpush.msra.mxu0 0.0
    %367 = vmatpush.msra.mxu0 0.0
    %v368 = vand.u32 %v243, 4294901760
    %v369 = vsub.f32 %v243, %v368
    %v370 = vand.u32 %v369, 4294901760
    %371 = vmatpush.msra.mxu0 %v370
    %v372 = vand.u32 %v228, 4294901760
    %v373 = vsub.f32 %v228, %v372
    %v374 = vand.u32 %v373, 4294901760
    %375 = vmatpush.msra.mxu0 %v374
    %v376 = vand.u32 %v239, 4294901760
    %377 = vmatmul.f32.gmra.mxu0 %v376
    %v378 = vpop.f32.mrf.mxu0
    %v379 = vadd.f32 %v352, %v378
    %380 = vdwg.mxu0
    %381 = vmatpush.msra.mxu0 0.0
    %382 = vmatpush.msra.mxu0 0.0
    %383 = vmatpush.msra.mxu0 0.0
    %384 = vmatpush.msra.mxu0 0.0
    %385 = vmatpush.msra.mxu0 0.0
    %386 = vmatpush.msra.mxu0 0.0
    %387 = vmatpush.msra.mxu0 0.0
    %388 = vmatpush.msra.mxu0 0.0
    %389 = vmatpush.msra.mxu0 0.0
    %390 = vmatpush.msra.mxu0 0.0
    %391 = vmatpush.msra.mxu0 0.0
    %392 = vmatpush.msra.mxu0 0.0
    %393 = vmatpush.msra.mxu0 0.0
    %394 = vmatpush.msra.mxu0 0.0
    %v395 = vand.u32 %v243, 4294901760
    %396 = vmatpush.msra.mxu0 %v395
    %v397 = vand.u32 %v228, 4294901760
    %398 = vmatpush.msra.mxu0 %v397
    %v399 = vand.u32 %v239, 4294901760
    %400 = vmatmul.f32.gmra.mxu0 %v399
    %v401 = vpop.f32.mrf.mxu0
    %v402 = vadd.f32 %v379, %v401
    %403 = vdwg.mxu0
    %v404 = vmax.f32 %v402, 0.0
    %v405 = vsub.f32 0.0, %v404
    %v406 = vmul.f32 %v405, 1.442695
    %v407 = vpow.pop %v406
    %v408 = vadd.f32 %v407, 1.0
    %v409 = vrcp.pop %v408
    %v410 = vmul.f32 %v408, %v409
    %v411 = vsub.f32 1.0, %v410
    %v412 = vmul.f32 %v409, %v411
    %v413 = vadd.f32 %v409, %v412
    %vm414 = vweird.f32 %v408
    %vm415 = vweird.f32 %v409
    %vm416 = vmor %vm414, %vm415
    %v417 = vsel %vm416, %v409, %v413
    %v418 = vand.u32 2147483647, %v408
    %vm419 = vcmp.eq.f32.partialorder %v418, 8.507059e+37
    %v420 = vand.u32 %v408, 2147483648
    %v421 = vor.u32 1.1754944e-38, %v420
    %v422 = vsel %vm419, %v421, %v417
    %v423 = vmul.f32 1.0, %v422
    %v424 = vld [vmem:[%s5] sm:$0x1]
    %v425 = vld [vmem:[#allocation2] sm:$0x1]
    %427 = vset.pattern.permute.xlu0 0
    %428 = vperm.xlu0 %427, %v425
    %v429 = vpop.permute.xlu0 %428
    %v431 = vperm.slane %v429, 0
    %v433 = vsel %vm44, %v424, 0
    %435 = vmatpush.msra.mxu0 0.0
    %436 = vmatpush.msra.mxu0 0.0
    %437 = vmatpush.msra.mxu0 0.0
    %438 = vmatpush.msra.mxu0 0.0
    %439 = vmatpush.msra.mxu0 0.0
    %440 = vmatpush.msra.mxu0 0.0
    %441 = vmatpush.msra.mxu0 0.0
    %442 = vmatpush.msra.mxu0 0.0
    %443 = vmatpush.msra.mxu0 0.0
    %444 = vmatpush.msra.mxu0 0.0
    %445 = vmatpush.msra.mxu0 0.0
    %446 = vmatpush.msra.mxu0 0.0
    %447 = vmatpush.msra.mxu0 0.0
    %448 = vmatpush.msra.mxu0 0.0
    %449 = vmatpush.msra.mxu0 0.0
    %v450 = vand.u32 %v423, 4294901760
    %451 = vmatpush.msra.mxu0 %v450
    %v452 = vand.u32 %v433, 4294901760
    %v453 = vsub.f32 %v433, %v452
    %v454 = vand.u32 %v453, 4294901760
    %v455 = vsub.f32 %v453, %v454
    %v456 = vand.u32 %v455, 4294901760
    %457 = vmatmul.f32.gmra.mxu0 %v456
    %v458 = vpop.f32.mrf.mxu0
    %v459 = vadd.f32 %v431, %v458
    %460 = vdwg.mxu0
    %461 = vmatpush.msra.mxu0 0.0
    %462 = vmatpush.msra.mxu0 0.0
    %463 = vmatpush.msra.mxu0 0.0
    %464 = vmatpush.msra.mxu0 0.0
    %465 = vmatpush.msra.mxu0 0.0
    %466 = vmatpush.msra.mxu0 0.0
    %467 = vmatpush.msra.mxu0 0.0
    %468 = vmatpush.msra.mxu0 0.0
    %469 = vmatpush.msra.mxu0 0.0
    %470 = vmatpush.msra.mxu0 0.0
    %471 = vmatpush.msra.mxu0 0.0
    %472 = vmatpush.msra.mxu0 0.0
    %473 = vmatpush.msra.mxu0 0.0
    %474 = vmatpush.msra.mxu0 0.0
    %475 = vmatpush.msra.mxu0 0.0
    %v476 = vand.u32 %v423, 4294901760
    %v477 = vsub.f32 %v423, %v476
    %v478 = vand.u32 %v477, 4294901760
    %v479 = vsub.f32 %v477, %v478
    %v480 = vand.u32 %v479, 4294901760
    %481 = vmatpush.msra.mxu0 %v480
    %v482 = vand.u32 %v433, 4294901760
    %483 = vmatmul.f32.gmra.mxu0 %v482
    %v484 = vpop.f32.mrf.mxu0
    %v485 = vadd.f32 %v459, %v484
    %486 = vdwg.mxu0
    %487 = vmatpush.msra.mxu0 0.0
    %488 = vmatpush.msra.mxu0 0.0
    %489 = vmatpush.msra.mxu0 0.0
    %490 = vmatpush.msra.mxu0 0.0
    %491 = vmatpush.msra.mxu0 0.0
    %492 = vmatpush.msra.mxu0 0.0
    %493 = vmatpush.msra.mxu0 0.0
    %494 = vmatpush.msra.mxu0 0.0
    %495 = vmatpush.msra.mxu0 0.0
    %496 = vmatpush.msra.mxu0 0.0
    %497 = vmatpush.msra.mxu0 0.0
    %498 = vmatpush.msra.mxu0 0.0
    %499 = vmatpush.msra.mxu0 0.0
    %500 = vmatpush.msra.mxu0 0.0
    %501 = vmatpush.msra.mxu0 0.0
    %v502 = vand.u32 %v423, 4294901760
    %v503 = vsub.f32 %v423, %v502
    %504 = vmatpush.msra.mxu0 %v503
    %v505 = vand.u32 %v433, 4294901760
    %v506 = vsub.f32 %v433, %v505
    %507 = vmatmul.f32.gmra.mxu0 %v506
    %v508 = vpop.f32.mrf.mxu0
    %v509 = vadd.f32 %v485, %v508
    %510 = vdwg.mxu0
    %511 = vmatpush.msra.mxu0 0.0
    %512 = vmatpush.msra.mxu0 0.0
    %513 = vmatpush.msra.mxu0 0.0
    %514 = vmatpush.msra.mxu0 0.0
    %515 = vmatpush.msra.mxu0 0.0
    %516 = vmatpush.msra.mxu0 0.0
    %517 = vmatpush.msra.mxu0 0.0
    %518 = vmatpush.msra.mxu0 0.0
    %519 = vmatpush.msra.mxu0 0.0
    %520 = vmatpush.msra.mxu0 0.0
    %521 = vmatpush.msra.mxu0 0.0
    %522 = vmatpush.msra.mxu0 0.0
    %523 = vmatpush.msra.mxu0 0.0
    %524 = vmatpush.msra.mxu0 0.0
    %525 = vmatpush.msra.mxu0 0.0
    %v526 = vand.u32 %v423, 4294901760
    %527 = vmatpush.msra.mxu0 %v526
    %v528 = vand.u32 %v433, 4294901760
    %v529 = vsub.f32 %v433, %v528
    %v530 = vand.u32 %v529, 4294901760
    %531 = vmatmul.f32.gmra.mxu0 %v530
    %v532 = vpop.f32.mrf.mxu0
    %v533 = vadd.f32 %v509, %v532
    %534 = vdwg.mxu0
    %535 = vmatpush.msra.mxu0 0.0
    %536 = vmatpush.msra.mxu0 0.0
    %537 = vmatpush.msra.mxu0 0.0
    %538 = vmatpush.msra.mxu0 0.0
    %539 = vmatpush.msra.mxu0 0.0
    %540 = vmatpush.msra.mxu0 0.0
    %541 = vmatpush.msra.mxu0 0.0
    %542 = vmatpush.msra.mxu0 0.0
    %543 = vmatpush.msra.mxu0 0.0
    %544 = vmatpush.msra.mxu0 0.0
    %545 = vmatpush.msra.mxu0 0.0
    %546 = vmatpush.msra.mxu0 0.0
    %547 = vmatpush.msra.mxu0 0.0
    %548 = vmatpush.msra.mxu0 0.0
    %549 = vmatpush.msra.mxu0 0.0
    %v550 = vand.u32 %v423, 4294901760
    %v551 = vsub.f32 %v423, %v550
    %v552 = vand.u32 %v551, 4294901760
    %553 = vmatpush.msra.mxu0 %v552
    %v554 = vand.u32 %v433, 4294901760
    %555 = vmatmul.f32.gmra.mxu0 %v554
    %v556 = vpop.f32.mrf.mxu0
    %v557 = vadd.f32 %v533, %v556
    %558 = vdwg.mxu0
    %559 = vmatpush.msra.mxu0 0.0
    %560 = vmatpush.msra.mxu0 0.0
    %561 = vmatpush.msra.mxu0 0.0
    %562 = vmatpush.msra.mxu0 0.0
    %563 = vmatpush.msra.mxu0 0.0
    %564 = vmatpush.msra.mxu0 0.0
    %565 = vmatpush.msra.mxu0 0.0
    %566 = vmatpush.msra.mxu0 0.0
    %567 = vmatpush.msra.mxu0 0.0
    %568 = vmatpush.msra.mxu0 0.0
    %569 = vmatpush.msra.mxu0 0.0
    %570 = vmatpush.msra.mxu0 0.0
    %571 = vmatpush.msra.mxu0 0.0
    %572 = vmatpush.msra.mxu0 0.0
    %573 = vmatpush.msra.mxu0 0.0
    %v574 = vand.u32 %v423, 4294901760
    %575 = vmatpush.msra.mxu0 %v574
    %v576 = vand.u32 %v433, 4294901760
    %577 = vmatmul.f32.gmra.mxu0 %v576
    %v578 = vpop.f32.mrf.mxu0
    %v579 = vadd.f32 %v557, %v578
    %580 = vdwg.mxu0
    %581 = vst [vmem:[#allocation3] sm:$0x1] %v579
    // Predicated region
    $region30: #{tpu_custom_call.1} parent=1 // pred_check
      _
    $region31: #{tpu_custom_call.1} parent=1 // pred_check_branch
      %583 = sbr.rel (0) target = $region33
    $region32: #{tpu_custom_call.1} parent=1 // pred_region
      %585 = vsyncadd [#allocation4], 0
      %s587 = sshll.u32 [#allocation3], 4
      %s588 = int_to_ptr.vmem [resolvable:$true] %s587
      %s589 = sshll.u32 %s7, 4
      %s590 = int_to_ptr.hbm [resolvable:$true] %s589
      %592 = dma.vmem_to_hbm [thread:$0]  %s588, 16, %s590, [#allocation4]
    $region33: #{tpu_custom_call.1} parent=1 // pred_fallthru
      _
    // Predicated region
    $region34: #{tpu_custom_call.1} parent=1 // pred_check
      _
    $region35: #{tpu_custom_call.1} parent=1 // pred_check_branch
      %594 = sbr.rel (0) target = $region37
    $region36: #{tpu_custom_call.1} parent=1 // pred_region
      %596 = dma.done [#allocation4], 16
    $region37: #{tpu_custom_call.1} parent=1 // pred_fallthru
      _
    %597 = vsyncpa [#allocation4], 1

</llo_original>
